<compile_context>
chip_gen: v6e
topology: v6e:2x2x1
jax: 0.10.0
libtpu: 0.0.40
codegen_flags: <defaults>
</compile_context>

<pallas_src>
import numpy as np
import jax
import jax.numpy as jnp
from jax.experimental import pallas as pl
from jax.experimental.pallas import tpu as pltpu


# ----------------------------- budgets & tiling --------------------------------

def _vmem_budget():
    """(block_budget_bytes, vmem_limit_bytes), generation-aware.

    v5e/v6e have 128 MiB VMEM -> bigger tiles (fewer ~0.35us grid steps);
    v7x has 64 MiB -> stay conservative."""
    try:
        cap = int(pltpu.get_tpu_info().vmem_capacity_bytes)
    except Exception:  # unknown / interpret: assume the smallest (v7x-like)
        cap = 64 << 20
    if cap >= (96 << 20):          # v5e / v6e (128 MiB physical)
        return 24 << 20, 48 << 20
    return 12 << 20, 32 << 20      # v7x (64 MiB physical)


def _pick_row_block(R, row_bytes, budget_bytes):
    """Row tile for the row-tiled path.

    Must be a multiple of 8 or the full extent (the (8,128) block rule); the
    grid uses cdiv so the last block may be partial (masked writes), which
    removes the old requirement that the tile divide R.  Capped so (a) the
    double-buffered in+tail+out tile fits `budget_bytes` and (b) there are at
    least 2 grid steps whenever R allows it (pipelining / v7x megacore)."""
    if R <= 8:
        return R                                   # full-extent block, always legal
    by_budget = max(8, (budget_bytes // row_bytes) // 8 * 8)
    by_steps = max(8, (R // 2) // 8 * 8)           # keep >= 2 grid steps
    return int(min(by_budget, by_steps))


# ----------------------------- tail construction -------------------------------

def _build_tail(x2, pad, mode):
    """Right-pad values, shape (R, pad).  Tiny (O(R*pad)); built with vectorized
    jnp ops in the wrapper so the kernel is a pure lane-dense copy."""
    R, T = x2.shape
    if mode == "constant":
        return jnp.zeros((R, pad), x2.dtype)
    if mode == "circular":                         # padded[T + i] = x[i]
        return x2[:, :pad]
    if mode == "replicate":                        # padded[T + i] = x[T - 1]
        return jnp.broadcast_to(x2[:, T - 1:T], (R, pad))
    if mode == "reflect":                          # padded[T + i] = x[T - 2 - i]
        return jnp.flip(x2[:, T - 1 - pad:T - 1], axis=1)
    raise NotImplementedError(f"padding_type={mode!r}")


# ----------------------------- Pallas kernels ----------------------------------

def _pad_rows_rowtiled(x2, tail, r_blk, vmem_limit):
    """Row-tiled copy: each block holds full rows; output block is lane-dense
    (last dim = T_pad).  Two vectorized stores per block: bulk + tail."""
    R, T = x2.shape
    pad = tail.shape[1]
    T_pad = T + pad
    itemsize = jnp.dtype(x2.dtype).itemsize

    def kernel(x_ref, tail_ref, o_ref):
        o_ref[:, pl.ds(0, T)] = x_ref[...]          # bulk copy
        o_ref[:, pl.ds(T, pad)] = tail_ref[...]     # whole tail in one store

    grid = ((R + r_blk - 1) // r_blk,)
    return pl.pallas_call(
        kernel,
        out_shape=jax.ShapeDtypeStruct((R, T_pad), x2.dtype),
        grid_spec=pltpu.PrefetchScalarGridSpec(
            num_scalar_prefetch=0,
            grid=grid,
            in_specs=[pl.BlockSpec((r_blk, T), lambda r: (r, 0)),
                      pl.BlockSpec((r_blk, pad), lambda r: (r, 0))],
            out_specs=pl.BlockSpec((r_blk, T_pad), lambda r: (r, 0)),
        ),
        compiler_params=pltpu.CompilerParams(
            dimension_semantics=("parallel",),       # rows are independent
            vmem_limit_bytes=vmem_limit),
        cost_estimate=pl.CostEstimate(               # HBM-bound copy, 0 flops
            flops=0, transcendentals=0,
            bytes_accessed=R * (T + pad + T_pad) * itemsize),
    )(x2, tail)


def _pad_rows_coltiled(x2, tail, r_blk, budget_bytes, vmem_limit):
    """Column-tiled fallback for long rows (or few, very long rows): the time
    axis is a second grid axis so each step fits VMEM and the pipeline has many
    steps to double-buffer.  The pad tail lives only in the last few column
    blocks and is patched in via pl.when with static slice bounds."""
    R, T = x2.shape
    pad = tail.shape[1]
    T_pad = T + pad
    itemsize = jnp.dtype(x2.dtype).itemsize

    # Columns per step: in + out blocks, double-buffered ~ 4 * r_blk * c_blk * itemsize.
    c_blk = max(128, (budget_bytes // (4 * r_blk * itemsize)) // 128 * 128)
    c_blk = min(c_blk, max(128, (T_pad // 2) // 128 * 128))   # >= 2 column steps
    n_col = (T_pad + c_blk - 1) // c_blk
    x_max_blk = (T - 1) // c_blk                               # last valid x column block
    # Column blocks (trace-time constants) that contain padded-tail columns.
    tail_blocks = list(range(T // c_blk, (T_pad - 1) // c_blk + 1))

    def kernel(x_ref, tail_ref, o_ref):
        c = pl.program_id(1)
        o_ref[...] = x_ref[...]                     # bulk (cols >= T fixed below)
        for cb in tail_blocks:
            lo = max(T - cb * c_blk, 0)             # block-local start of the tail
            hi = min(T_pad - cb * c_blk, c_blk)     # block-local end of the tail
            src = cb * c_blk + lo - T               # offset into the tail array
            n = hi - lo

            @pl.when(c == cb)
            def _(lo=lo, src=src, n=n):
                o_ref[:, pl.ds(lo, n)] = tail_ref[:, pl.ds(src, n)]

    grid = ((R + r_blk - 1) // r_blk, n_col)
    return pl.pallas_call(
        kernel,
        out_shape=jax.ShapeDtypeStruct((R, T_pad), x2.dtype),
        grid_spec=pltpu.PrefetchScalarGridSpec(
            num_scalar_prefetch=0,
            grid=grid,
            in_specs=[
                # Clamp the column block so fully-past-T blocks still fetch a
                # valid window (their contents are overwritten by the tail).
                pl.BlockSpec((r_blk, c_blk),
                             lambda r, c: (r, jnp.minimum(c, x_max_blk))),
                pl.BlockSpec((r_blk, pad), lambda r, c: (r, 0)),
            ],
            out_specs=pl.BlockSpec((r_blk, c_blk), lambda r, c: (r, c)),
        ),
        compiler_params=pltpu.CompilerParams(
            dimension_semantics=("parallel", "arbitrary"),
            vmem_limit_bytes=vmem_limit),
        cost_estimate=pl.CostEstimate(
            flops=0, transcendentals=0,
            bytes_accessed=R * (T + pad + T_pad) * itemsize),
    )(x2, tail)


def _pad_rows_pallas(x2, pad, mode, *, budget_bytes=None):
    """x2: (R, T) -> (R, T + pad), right-padded per `mode` (pad > 0)."""
    R, T = x2.shape
    T_pad = T + pad
    itemsize = jnp.dtype(x2.dtype).itemsize

    default_budget, vmem_limit = _vmem_budget()
    if budget_bytes is None:
        budget_bytes = default_budget

    tail = _build_tail(x2, pad, mode)

    # Per-row VMEM footprint on the row-tiled path: in + tail + out, double-buffered.
    row_bytes = 2 * (T + pad + T_pad) * itemsize
    min_rows = R if R <= 8 else 8
    row_fits = min_rows * row_bytes <= budget_bytes

    use_cols = False
    if T_pad >= 256:                               # column tiling only meaningful then
        if not row_fits:
            use_cols = True                        # VMEM guard (v7x hits this first)
        else:
            r_blk_try = _pick_row_block(R, row_bytes, budget_bytes)
            single_step = (R + r_blk_try - 1) // r_blk_try < 2
            # Large single-step problems get no pipelining -> tile time instead.
            use_cols = single_step and (R * row_bytes > (2 << 20))

    if use_cols:
        return _pad_rows_coltiled(x2, tail, min_rows, budget_bytes, vmem_limit)
    r_blk = _pick_row_block(R, row_bytes, max(budget_bytes, min_rows * row_bytes))
    return _pad_rows_rowtiled(x2, tail, r_blk, vmem_limit)


# ----------------------------- Unfold1D module ---------------------------------

class Unfold1D:
    """JAX/Pallas port of Unfold1D: right-pad the time axis to a multiple of
    patch_size, then chop into patches: (B, C, T) -> (B, num_patches, -1)."""

    _SUPPORTED = ("reflect", "replicate", "circular", "constant")

    def __init__(self, patch_size=200, use_padding=True, padding_type="reflect"):
        assert padding_type in self._SUPPORTED, padding_type
        self.patch_size = int(patch_size)
        self.use_padding = use_padding
        self.padding_type = padding_type

    def __call__(self, data):
        assert data.ndim == 3
        B, C, T = data.shape
        if self.use_padding and T % self.patch_size != 0:
            pad = self.patch_size - T % self.patch_size
        else:
            pad = 0
        T_pad = T + pad
        num_patches = T_pad // self.patch_size
        if num_patches == 0 or (C * T_pad) % num_patches != 0:
            raise ValueError(
                f"cannot reshape (B={B}, C={C}, T_pad={T_pad}) into "
                f"{num_patches} patches of equal size")

        if pad == 0:
            # No padding needed: the reshape is a free row-major view -> no
            # HBM traffic, no kernel.
            return data.reshape(B, num_patches, -1)

        if self.padding_type == "reflect":
            assert pad <= T - 1, "reflect padding requires pad < T"
        elif self.padding_type == "circular":
            assert pad <= T, "circular padding requires pad <= T"

        # (B, C, T) -> (B*C, T): free row-major view; padding acts per (b,c) row.
        y = _pad_rows_pallas(data.reshape(B * C, T), pad, self.padding_type)
        # (B*C, T_pad) -> (B, num_patches, -1): free row-major views, identical
        # to torch.reshape on the contiguous padded (B, C, T_pad) tensor.
        return y.reshape(B, num_patches, -1)

    forward = __call__


# --------------------------------- demo -----------------------------------------

if __name__ == "__main__":
    key = jax.random.PRNGKey(0)
    k1, k2, k3, k4 = jax.random.split(key, 4)

    # Case 1: main row-tiled path. (B, C=1, T) audio rows, reflect padding.
    B, C, T, patch = 2, 1, 200, 32                 # pad = 24, num_patches = 7
    x = jax.random.normal(k1, (B, C, T), dtype=jnp.float32)
    out = Unfold1D(patch_size=patch, use_padding=True, padding_type="reflect")(x)
    jax.block_until_ready(out)
    pad = patch - T % patch
    ref = jnp.pad(x, ((0, 0), (0, 0), (0, pad)), mode="reflect")
    ref = ref.reshape(B, (T + pad) // patch, -1)
    np.testing.assert_array_equal(np.asarray(out), np.asarray(ref))
    assert out.shape == (B, (T + pad) // patch, C * patch)

    # Case 2: T already a multiple of patch_size -> kernel bypassed entirely.
    x2 = jax.random.normal(k2, (2, 1, 256), dtype=jnp.float32)
    out2 = Unfold1D(patch_size=32)(x2)
    jax.block_until_ready(out2)
    np.testing.assert_array_equal(np.asarray(out2),
                                  np.asarray(x2.reshape(2, 8, 32)))

    # Case 3: R = B*C = 12 (not a multiple of 8) -> masked-edge row grid.
    B3, C3, T3, patch3 = 3, 4, 100, 32             # pad = 28
    x3 = jax.random.normal(k3, (B3, C3, T3), dtype=jnp.float32)
    out3 = Unfold1D(patch_size=patch3, padding_type="replicate")(x3)
    jax.block_until_ready(out3)
    pad3 = patch3 - T3 % patch3
    ref3 = jnp.pad(x3, ((0, 0), (0, 0), (0, pad3)), mode="edge")
    ref3 = ref3.reshape(B3, (T3 + pad3) // patch3, -1)
    np.testing.assert_array_equal(np.asarray(out3), np.asarray(ref3))

    # Case 4: force the column-tiled (long-row) fallback with a tiny budget.
    B4, C4, T4, patch4 = 2, 1, 700, 256            # pad = 68, T_pad = 768
    x4 = jax.random.normal(k4, (B4, C4, T4), dtype=jnp.float32)
    pad4 = patch4 - T4 % patch4
    y4 = _pad_rows_pallas(x4.reshape(B4 * C4, T4), pad4, "reflect",
                          budget_bytes=4096)
    jax.block_until_ready(y4)
    ref4 = jnp.pad(x4.reshape(B4 * C4, T4), ((0, 0), (0, pad4)), mode="reflect")
    np.testing.assert_array_equal(np.asarray(y4), np.asarray(ref4))

    print("KERNEL_OK")
</pallas_src>

<mosaic_0001>
module attributes {stable_mosaic.version = 11 : i64} {
  func.func @kernel(%arg0: i32, %arg1: memref<2x200xf32, #tpu.memory_space<vmem>>, %arg2: memref<2x24xf32, #tpu.memory_space<vmem>>, %arg3: memref<2x224xf32, #tpu.memory_space<vmem>>) attributes {dimension_semantics = [#tpu.dimension_semantics<parallel>], iteration_bounds = array<i64: 1>, scalar_prefetch = 0 : i64, scratch_operands = 0 : i64, tpu.core_type = #tpu.core_type<tc>, window_params = [{transform_indices = @transform_0, window_bounds = array<i64: 2, 200>}, {transform_indices = @transform_1, window_bounds = array<i64: 2, 24>}, {transform_indices = @transform_2, window_bounds = array<i64: 2, 224>}]} {
    %c0 = arith.constant 0 : index
    %c0_0 = arith.constant 0 : index
    %0 = vector.load %arg1[%c0, %c0_0] : memref<2x200xf32, #tpu.memory_space<vmem>>, vector<2x200xf32>
    %c0_1 = arith.constant 0 : index
    %c0_2 = arith.constant 0 : index
    %1 = vector.load %arg3[%c0_1, %c0_2] : memref<2x224xf32, #tpu.memory_space<vmem>>, vector<2x200xf32>
    tpu.vector_store %arg3[%c0_1, %c0_2], %0 {strides = array<i32>} : memref<2x224xf32, #tpu.memory_space<vmem>>, vector<2x200xf32>,
    %c0_3 = arith.constant 0 : index
    %c0_4 = arith.constant 0 : index
    %2 = vector.load %arg2[%c0_3, %c0_4] : memref<2x24xf32, #tpu.memory_space<vmem>>, vector<2x24xf32>
    %c0_5 = arith.constant 0 : index
    %c200 = arith.constant 200 : index
    %3 = vector.load %arg3[%c0_5, %c200] : memref<2x224xf32, #tpu.memory_space<vmem>>, vector<2x24xf32>
    tpu.vector_store %arg3[%c0_5, %c200], %2 {strides = array<i32>} : memref<2x224xf32, #tpu.memory_space<vmem>>, vector<2x24xf32>,
    return
  }
  func.func @transform_0(%arg0: i32) -> (i32, i32) {
    %c0_i32 = arith.constant 0 : i32
    %c0_i32_0 = arith.constant 0 : i32
    return %arg0, %c0_i32 : i32, i32
  }
  func.func @transform_1(%arg0: i32) -> (i32, i32) {
    %c0_i32 = arith.constant 0 : i32
    %c0_i32_0 = arith.constant 0 : i32
    return %arg0, %c0_i32 : i32, i32
  }
  func.func @transform_2(%arg0: i32) -> (i32, i32) {
    %c0_i32 = arith.constant 0 : i32
    %c0_i32_0 = arith.constant 0 : i32
    return %arg0, %c0_i32 : i32, i32
  }
}

</mosaic_0001>

<llo_original>
// kernel: tpu_custom_call.1
$region0: #{tpu_custom_call.1}
  #allocation0 [shape = 'u32[]', space=smem, size = 0x4, offset = 0x4, fixed_abs, tag = 'smem constant byte address 0x4 - core index']
  #allocation1 [shape = 'u32[144,128]{1,0:T(1,128)}', space=vmem, size = 0x12000, scoped, tag = 'internal scratch']
  %s0 = inlined_call_operand.hbm [shape: f32[2,200], index: 0, kind: input, shape index: {}]
  %s1 = inlined_call_operand.hbm [shape: f32[2,24], index: 1, kind: input, shape index: {}]
  %s2 = inlined_call_operand.hbm [shape: f32[2,224], index: 2, kind: output, shape index: {}]
  %s3 = sld [smem:[#allocation0]]
  $region26: #{tpu_custom_call.1} parent=0
    _
  %s5 = ssub.s32 1, %s3
  %s6 = scalar_select 0, %s5, %s3
  $region1: #{tpu_custom_call.1} parent=0
    #allocation2 [shape = 'u8[2048]{0}', space=vmem, size = 0x800, scoped, tag = 'input window, operand 0, single buffered']
    #allocation3 [shape = 's32[1]{0}', space=sflag, size = 0x4, scoped, tag = 'scoped memory for tpu_custom_call.1']
    #allocation4 [shape = 's32[1]{0}', space=sflag, size = 0x4, scoped, tag = 'scoped memory for tpu_custom_call.1']
    #allocation5 [shape = 'u8[1024]{0}', space=vmem, size = 0x400, scoped, tag = 'input window, operand 1, single buffered']
    #allocation6 [shape = 's32[1]{0}', space=sflag, size = 0x4, scoped, tag = 'scoped memory for tpu_custom_call.1']
    #allocation7 [shape = 'u8[2048]{0}', space=vmem, size = 0x800, scoped, tag = 'output window, operand 0, single buffered']
    %7 = vsyncpa [#allocation3], 0
    %8 = vsyncpa [#allocation6], 0
    %9 = vsyncpa [#allocation4], 0
    // Predicated region
    $region2: #{tpu_custom_call.1} parent=1 // pred_check
      _
    $region3: #{tpu_custom_call.1} parent=1 // pred_check_branch
      %11 = sbr.rel (0) target = $region5
    $region4: #{tpu_custom_call.1} parent=1 // pred_region
      %s13 = ssub.s32 64, 64
      %14 = vsyncadd [#allocation3], %s13
      %s16 = sshll.u32 [#allocation2], 4
      %s17 = int_to_ptr.vmem [resolvable:$true] %s16
      %19 = dma.hbm_to_vmem [thread:$0]  %s0, 64, %s17, [#allocation3]
    $region5: #{tpu_custom_call.1} parent=1 // pred_fallthru
      _
    // Predicated region
    $region6: #{tpu_custom_call.1} parent=1 // pred_check
      _
    $region7: #{tpu_custom_call.1} parent=1 // pred_check_branch
      %21 = sbr.rel (0) target = $region9
    $region8: #{tpu_custom_call.1} parent=1 // pred_region
      %s23 = ssub.s32 32, 32
      %24 = vsyncadd [#allocation6], %s23
      %s26 = sshll.u32 [#allocation5], 4
      %s27 = int_to_ptr.vmem [resolvable:$true] %s26
      %29 = dma.hbm_to_vmem [thread:$0]  %s1, 32, %s27, [#allocation6]
    $region9: #{tpu_custom_call.1} parent=1 // pred_fallthru
      _
    // Predicated region
    $region10: #{tpu_custom_call.1} parent=1 // pred_check
      _
    $region11: #{tpu_custom_call.1} parent=1 // pred_check_branch
      %31 = sbr.rel (0) target = $region13
    $region12: #{tpu_custom_call.1} parent=1 // pred_region
      %32 = dma.done [#allocation3], 64
    $region13: #{tpu_custom_call.1} parent=1 // pred_fallthru
      _
    // Predicated region
    $region14: #{tpu_custom_call.1} parent=1 // pred_check
      _
    $region15: #{tpu_custom_call.1} parent=1 // pred_check_branch
      %34 = sbr.rel (0) target = $region17
    $region16: #{tpu_custom_call.1} parent=1 // pred_region
      %35 = dma.done [#allocation6], 32
    $region17: #{tpu_custom_call.1} parent=1 // pred_fallthru
      _
    %v36 = vld [vmem:[#allocation2] sm:$0xf]
    %vm37 = vcmask 1041408
    %vm38 = vcmask 584706
    %vm39 = vmor %vm38, %vm37
    %40 = vst.msk [vmem:[#allocation7] sm:$0xf] %vm39, %v36
    %v41 = vld [vmem:[#allocation5] sm:$0x3]
    %v44 = vunpack.c.l.s4 1983009808
    %v45 = vunpack.c.0.s8 %v44
    %v46 = vlaneseq
    %v47 = vshrl.u32 %v46, 7
    %v48 = vsub.s32 %v45, %v47
    %v49 = vrot.slane %v41, %v48
    %50 = vrot.lane.b32.xlu0 %v49, 72
    %v51 = vpop.permute.xlu0 %50
    %vm53 = vcmask 779840
    %54 = vst.msk [vmem:[#allocation7 + $0x2] sm:$0x3] %vm53, %v51
    // Predicated region
    $region18: #{tpu_custom_call.1} parent=1 // pred_check
      _
    $region19: #{tpu_custom_call.1} parent=1 // pred_check_branch
      %56 = sbr.rel (0) target = $region21
    $region20: #{tpu_custom_call.1} parent=1 // pred_region
      %s58 = ssub.s32 64, 64
      %59 = vsyncadd [#allocation4], %s58
      %s61 = sshll.u32 [#allocation7], 4
      %s62 = int_to_ptr.vmem [resolvable:$true] %s61
      %64 = dma.vmem_to_hbm [thread:$0]  %s62, 64, %s2, [#allocation4]
    $region21: #{tpu_custom_call.1} parent=1 // pred_fallthru
      _
    // Predicated region
    $region22: #{tpu_custom_call.1} parent=1 // pred_check
      _
    $region23: #{tpu_custom_call.1} parent=1 // pred_check_branch
      %66 = sbr.rel (0) target = $region25
    $region24: #{tpu_custom_call.1} parent=1 // pred_region
      %67 = dma.done [#allocation4], 64
    $region25: #{tpu_custom_call.1} parent=1 // pred_fallthru
      _
    %68 = vsyncpa [#allocation3], 1
    %69 = vsyncpa [#allocation6], 1
    %70 = vsyncpa [#allocation4], 1

</llo_original>
